<compile_context>
chip_gen: v7x
topology: tpu7x:2x2x1
jax: 0.10.0
libtpu: 0.0.40
codegen_flags: <defaults>
</compile_context>

<pallas_src>
import jax
import jax.numpy as jnp
import numpy as np
from jax import lax
from jax.experimental import pallas as pl
from jax.experimental.pallas import tpu as pltpu


def _efe_kernel(s_ref, b_ref, aux_ref, r_ref):
    """One row-tile of the negative-EFE reward.

    s_ref   : (TR, K)    predictive state distribution rows (any float dtype)
    b_ref   : (TR, K)    predictive belief distribution rows
    aux_ref : (2,  K)    row 0 = log_softmax(C), row 1 = H   (precomputed f32)
    r_ref   : (1, 1, TR) reward, lane-dense: one lane per input row
    """
    # Cast per-tile in-kernel so HBM-side storage can stay bf16 upstream.
    s = s_ref[...].astype(jnp.float32)
    b = b_ref[...].astype(jnp.float32)

    aux = aux_ref[...]            # (2, K) f32
    log_c = aux[0:1, :]           # (1, K), broadcast over rows
    h = aux[1:2, :]               # (1, K)

    # xlogy guard: 0 * log 0 := 0 (matches torch Categorical-KL convention and
    # keeps garbage rows of a ragged last tile from blowing up; those output
    # lanes are sliced off in the wrapper anyway).
    xlogb = jnp.where(b > 0, b * jnp.log(b), 0.0)

    # Elementwise integrand of  r = sum_k [ b*log_c - b*log b - s*H ]   (VPU).
    e = b * log_c - xlogb - s * h                         # (TR, K)

    # Reduce over K on the MXU, producing a lane-dense (·, TR) row directly:
    #   ones(8, K) @ e^T  ==  einsum('ik,rk->ir')  (all 8 rows identical).
    # HIGHEST precision => full f32 accuracy for the f32 contraction.
    ones_rows = jnp.ones((8, e.shape[-1]), dtype=jnp.float32)
    r_rows = lax.dot_general(
        ones_rows, e,
        dimension_numbers=(((1,), (1,)), ((), ())),
        preferred_element_type=jnp.float32,
        precision=lax.Precision.HIGHEST)                  # (8, TR)

    r_ref[...] = r_rows[0:1, :][None]                     # (1, 1, TR)


def expected_free_energy(s_next, b_next, C, H):
    """r = -KL(b_next || softmax(C)) - sum(s_next * H, -1).

    s_next, b_next : [..., state_dim]
    C              : [1, state_dim]  raw logits (nn.Parameter analogue)
    H              : [1, state_dim]  per-state observation entropy
    returns        : [...]           (leading dims of the inputs)
    """
    assert s_next.shape == b_next.shape
    assert s_next.shape[-1] == C.shape[-1]
    lead_shape = s_next.shape[:-1]
    K = s_next.shape[-1]
    R = int(np.prod(lead_shape)) if lead_shape else 1

    # Flatten leading dims only: metadata reshape, no dtype cast, no padding copy.
    s2 = s_next.reshape(R, K)
    b2 = b_next.reshape(R, K)

    # Hoist log_softmax(C) out of the per-tile body (one-time 1xK op) and fold
    # it with H into a single (2, K) auxiliary operand.
    log_c = jax.nn.log_softmax(C.reshape(1, K).astype(jnp.float32), axis=-1)
    aux = jnp.concatenate([log_c, H.reshape(1, K).astype(jnp.float32)], axis=0)

    # Tile sizing: cap the per-block working set at ~2 MiB so
    # (2 inputs x 2 pipeline buffers) stays far below every generation's
    # scoped-VMEM default (16 MiB on v5e, 32 MiB on v6e/v7x).
    bytes_per_row = 4 * K
    row_cap = max(8, min(1024, ((2 * 1024 * 1024) // bytes_per_row) // 8 * 8))

    if R <= row_cap:
        # Single grid step covering everything: at small R the kernel is pure
        # per-step overhead, so one step is strictly fastest.
        row_tile, num_tiles = R, 1
    else:
        # Big 8-aligned tiles; ragged last tile handled by Pallas OOB-read
        # padding + masked writeback (tail lanes sliced off below).  Multiple
        # tiles on the "parallel" axis shard across the two TCs on v7x.
        row_tile = row_cap
        num_tiles = pl.cdiv(R, row_tile)

    out = pl.pallas_call(
        _efe_kernel,
        out_shape=jax.ShapeDtypeStruct((num_tiles, 1, row_tile), jnp.float32),
        grid_spec=pltpu.PrefetchScalarGridSpec(
            num_scalar_prefetch=0,
            grid=(num_tiles,),
            in_specs=[
                pl.BlockSpec((row_tile, K), lambda i: (i, 0)),
                pl.BlockSpec((row_tile, K), lambda i: (i, 0)),
                pl.BlockSpec((2, K), lambda i: (0, 0)),
            ],
            out_specs=pl.BlockSpec((1, 1, row_tile), lambda i: (i, 0, 0)),
        ),
        compiler_params=pltpu.CompilerParams(
            dimension_semantics=("parallel",)),
    )(s2, b2, aux)

    r_flat = out.reshape(num_tiles * row_tile)[:R]
    return r_flat.reshape(lead_shape)


def _reference(s_next, b_next, C, H):
    log_c = jax.nn.log_softmax(C.reshape(1, -1).astype(jnp.float32), axis=-1)
    kl = jnp.sum(b_next * (jnp.log(b_next) - log_c), axis=-1)
    eh = jnp.sum(s_next * H.reshape(1, -1), axis=-1)
    return -kl - eh


if __name__ == "__main__":
    key = jax.random.PRNGKey(0)
    batch, act_dim, state_dim, obs_dim = 2, 4, 32, 16

    k_s, k_b, k_c, k_a = jax.random.split(key, 4)

    # predictive state / belief distributions over state_dim (valid simplex rows)
    s_next = jax.nn.softmax(
        jax.random.normal(k_s, (batch, act_dim, state_dim), jnp.float32), axis=-1)
    b_next = jax.nn.softmax(
        jax.random.normal(k_b, (batch, act_dim, state_dim), jnp.float32), axis=-1)

    # reward prior C: nn.Parameter of shape (1, state_dim), xavier_normal_(gain=1)
    xavier_std = float(np.sqrt(2.0 / (1 + state_dim)))
    C = jax.random.normal(k_c, (1, state_dim), jnp.float32) * xavier_std

    # synthetic observation model: A logits [obs_dim, state_dim];
    # obs_model.entropy(A)[s] = entropy of softmax(A[:, s]) -> shape (1, state_dim)
    A_logits = jax.random.normal(k_a, (obs_dim, state_dim), jnp.float32)
    p_obs = jax.nn.softmax(A_logits, axis=0)
    H = -jnp.sum(p_obs * jnp.log(p_obs), axis=0, keepdims=True)   # (1, state_dim)

    r = expected_free_energy(s_next, b_next, C, H)
    r = jax.block_until_ready(r)

    r_ref = _reference(s_next.reshape(-1, state_dim),
                       b_next.reshape(-1, state_dim),
                       C, H).reshape(batch, act_dim)

    np.testing.assert_allclose(np.asarray(r), np.asarray(r_ref), rtol=1e-5, atol=1e-5)
    assert r.shape == (batch, act_dim)
    print("KERNEL_OK")
</pallas_src>

<mosaic_0001>
module attributes {stable_mosaic.version = 11 : i64} {
  func.func @_efe_kernel(%arg0: i32, %arg1: memref<8x32xf32, #tpu.memory_space<vmem>>, %arg2: memref<8x32xf32, #tpu.memory_space<vmem>>, %arg3: memref<2x32xf32, #tpu.memory_space<vmem>>, %arg4: memref<1x1x8xf32, #tpu.memory_space<vmem>>) attributes {dimension_semantics = [#tpu.dimension_semantics<parallel>], iteration_bounds = array<i64: 1>, scalar_prefetch = 0 : i64, scratch_operands = 0 : i64, tpu.core_type = #tpu.core_type<tc>, window_params = [{transform_indices = @transform_0, window_bounds = array<i64: 8, 32>}, {transform_indices = @transform_1, window_bounds = array<i64: 8, 32>}, {pipeline_mode = #tpu.pipeline_mode<synchronous>, transform_indices = @transform_2, window_bounds = array<i64: 2, 32>}, {transform_indices = @transform_3, window_bounds = array<i64: 1, 1, 8>}]} {
    %c0 = arith.constant 0 : index
    %c0_0 = arith.constant 0 : index
    %0 = vector.load %arg1[%c0, %c0_0] : memref<8x32xf32, #tpu.memory_space<vmem>>, vector<8x32xf32>
    %c0_1 = arith.constant 0 : index
    %c0_2 = arith.constant 0 : index
    %1 = vector.load %arg2[%c0_1, %c0_2] : memref<8x32xf32, #tpu.memory_space<vmem>>, vector<8x32xf32>
    %c0_3 = arith.constant 0 : index
    %c0_4 = arith.constant 0 : index
    %2 = vector.load %arg3[%c0_3, %c0_4] : memref<2x32xf32, #tpu.memory_space<vmem>>, vector<2x32xf32>
    %3 = vector.extract_strided_slice %2 {offsets = [0, 0], sizes = [1, 32], strides = [1, 1]} : vector<2x32xf32> to vector<1x32xf32>
    %4 = vector.extract_strided_slice %2 {offsets = [1, 0], sizes = [1, 32], strides = [1, 1]} : vector<2x32xf32> to vector<1x32xf32>
    %cst = arith.constant 0.000000e+00 : f32
    %5 = vector.broadcast %cst : f32 to vector<8x32xf32>
    %6 = arith.cmpf ogt, %1, %5 : vector<8x32xf32>
    %7 = math.log %1 : vector<8x32xf32>
    %8 = arith.mulf %1, %7 : vector<8x32xf32>
    %cst_5 = arith.constant 0.000000e+00 : f32
    %9 = vector.broadcast %cst_5 : f32 to vector<8x32xf32>
    %10 = arith.select %6, %8, %9 : vector<8x32xi1>, vector<8x32xf32>
    %11 = vector.broadcast %3 : vector<1x32xf32> to vector<8x32xf32>
    %12 = arith.mulf %1, %11 : vector<8x32xf32>
    %13 = arith.subf %12, %10 : vector<8x32xf32>
    %14 = vector.broadcast %4 : vector<1x32xf32> to vector<8x32xf32>
    %15 = arith.mulf %0, %14 : vector<8x32xf32>
    %16 = arith.subf %13, %15 : vector<8x32xf32>
    %cst_6 = arith.constant 1.000000e+00 : f32
    %17 = vector.broadcast %cst_6 : f32 to vector<8x32xf32>
    %cst_7 = arith.constant dense<0.000000e+00> : vector<8x8xf32>
    %18 = tpu.matmul %17, %16, %cst_7 {dimension_numbers = #tpu.dot_dimension_numbers<[1], [1], [0], [0], [0, 0, 1, 0], [], []>, precision = #tpu.contract_precision<fp32>} : vector<8x32xf32>, vector<8x32xf32>, vector<8x8xf32> -> vector<8x8xf32>
    %19 = vector.extract_strided_slice %18 {offsets = [0, 0], sizes = [1, 8], strides = [1, 1]} : vector<8x8xf32> to vector<1x8xf32>
    %20 = vector.shape_cast %19 : vector<1x8xf32> to vector<1x1x8xf32>
    %c0_8 = arith.constant 0 : index
    %c0_9 = arith.constant 0 : index
    %c0_10 = arith.constant 0 : index
    %21 = vector.load %arg4[%c0_8, %c0_9, %c0_10] : memref<1x1x8xf32, #tpu.memory_space<vmem>>, vector<1x1x8xf32>
    tpu.vector_store %arg4[%c0_8, %c0_9, %c0_10], %20 {strides = array<i32>} : memref<1x1x8xf32, #tpu.memory_space<vmem>>, vector<1x1x8xf32>,
    return
  }
  func.func @transform_0(%arg0: i32) -> (i32, i32) {
    %c0_i32 = arith.constant 0 : i32
    %c0_i32_0 = arith.constant 0 : i32
    return %arg0, %c0_i32 : i32, i32
  }
  func.func @transform_1(%arg0: i32) -> (i32, i32) {
    %c0_i32 = arith.constant 0 : i32
    %c0_i32_0 = arith.constant 0 : i32
    return %arg0, %c0_i32 : i32, i32
  }
  func.func @transform_2(%arg0: i32) -> (i32, i32) {
    %c0_i32 = arith.constant 0 : i32
    %c0_i32_0 = arith.constant 0 : i32
    %c0_i32_1 = arith.constant 0 : i32
    return %c0_i32, %c0_i32_0 : i32, i32
  }
  func.func @transform_3(%arg0: i32) -> (i32, i32, i32) {
    %c0_i32 = arith.constant 0 : i32
    %c0_i32_0 = arith.constant 0 : i32
    %c0_i32_1 = arith.constant 0 : i32
    return %arg0, %c0_i32, %c0_i32_0 : i32, i32, i32
  }
}

</mosaic_0001>

<llo_original>
// kernel: tpu_custom_call.1
$region0: #{tpu_custom_call.1}
  #allocation0 [shape = 'u32[]', space=smem, size = 0x4, offset = 0x4, fixed_abs, tag = 'smem constant byte address 0x4 - core index']
  #allocation1 [shape = 'u32[144,128]{1,0:T(1,128)}', space=vmem, size = 0x12000, scoped, tag = 'internal scratch']
  %s0 = inlined_call_operand.hbm [shape: f32[8,32], index: 0, kind: input, shape index: {}]
  %s1 = inlined_call_operand.hbm [shape: f32[8,32], index: 1, kind: input, shape index: {}]
  %s2 = inlined_call_operand.vmem [shape: f32[2,32], index: 2, kind: input, shape index: {}]
  %s3 = inlined_call_operand.hbm [shape: f32[1,1,8], index: 3, kind: output, shape index: {}]
  %s4 = sld [smem:[#allocation0]]
  $region30: #{tpu_custom_call.1} parent=0
    _
  %s6 = ssub.s32 1, %s4
  %s7 = scalar_select 0, %s6, %s4
  $region1: #{tpu_custom_call.1} parent=0
    #allocation2 [shape = 'u8[4096]{0}', space=vmem, size = 0x1000, scoped, tag = 'input window, operand 0, single buffered']
    #allocation3 [shape = 's32[1]{0}', space=sflag, size = 0x4, scoped, tag = 'scoped memory for tpu_custom_call.1']
    #allocation4 [shape = 's32[1]{0}', space=sflag, size = 0x4, scoped, tag = 'scoped memory for tpu_custom_call.1']
    #allocation5 [shape = 'u8[4096]{0}', space=vmem, size = 0x1000, scoped, tag = 'input window, operand 1, single buffered']
    #allocation6 [shape = 's32[1]{0}', space=sflag, size = 0x4, scoped, tag = 'scoped memory for tpu_custom_call.1']
    #allocation7 [shape = 'u8[512]{0}', space=vmem, size = 0x400, scoped, tag = 'output window, operand 0, single buffered']
    %8 = vsyncpa [#allocation3], 0
    %9 = vsyncpa [#allocation6], 0
    %10 = vsyncpa [#allocation4], 0
    // Predicated region
    $region2: #{tpu_custom_call.1} parent=1 // pred_check
      _
    $region3: #{tpu_custom_call.1} parent=1 // pred_check_branch
      %12 = sbr.rel (0) target = $region5
    $region4: #{tpu_custom_call.1} parent=1 // pred_region
      %s14 = ssub.s32 128, 128
      %15 = vsyncadd [#allocation3], %s14
      %s17 = sshll.u32 [#allocation2], 4
      %s18 = int_to_ptr.vmem [resolvable:$true] %s17
      %20 = dma.hbm_to_vmem [thread:$0]  %s0, 128, %s18, [#allocation3]
    $region5: #{tpu_custom_call.1} parent=1 // pred_fallthru
      _
    // Predicated region
    $region6: #{tpu_custom_call.1} parent=1 // pred_check
      _
    $region7: #{tpu_custom_call.1} parent=1 // pred_check_branch
      %22 = sbr.rel (0) target = $region9
    $region8: #{tpu_custom_call.1} parent=1 // pred_region
      %s24 = ssub.s32 128, 128
      %25 = vsyncadd [#allocation6], %s24
      %s27 = sshll.u32 [#allocation5], 4
      %s28 = int_to_ptr.vmem [resolvable:$true] %s27
      %30 = dma.hbm_to_vmem [thread:$0]  %s1, 128, %s28, [#allocation6]
    $region9: #{tpu_custom_call.1} parent=1 // pred_fallthru
      _
    // Predicated region
    $region10: #{tpu_custom_call.1} parent=1 // pred_check
      _
    $region11: #{tpu_custom_call.1} parent=1 // pred_check_branch
      %32 = sbr.rel (0) target = $region13
    $region12: #{tpu_custom_call.1} parent=1 // pred_region
      _
    $region13: #{tpu_custom_call.1} parent=1 // pred_fallthru
      _
    // Predicated region
    $region14: #{tpu_custom_call.1} parent=1 // pred_check
      _
    $region15: #{tpu_custom_call.1} parent=1 // pred_check_branch
      %34 = sbr.rel (0) target = $region17
    $region16: #{tpu_custom_call.1} parent=1 // pred_region
      %35 = dma.done [#allocation3], 128
    $region17: #{tpu_custom_call.1} parent=1 // pred_fallthru
      _
    // Predicated region
    $region18: #{tpu_custom_call.1} parent=1 // pred_check
      _
    $region19: #{tpu_custom_call.1} parent=1 // pred_check_branch
      %37 = sbr.rel (0) target = $region21
    $region20: #{tpu_custom_call.1} parent=1 // pred_region
      %38 = dma.done [#allocation6], 128
    $region21: #{tpu_custom_call.1} parent=1 // pred_fallthru
      _
    %v39 = vld [vmem:[#allocation2] sm:$0xff]
    %v40 = vld [vmem:[#allocation5] sm:$0xff]
    %v41 = vld [vmem:[%s2] sm:$0x3]
    %vm42 = vcmp.gt.f32.partialorder %v40, 0.0
    %v43 = vlog2.pop %v40
    %v44 = vmul.f32 %v43, 0.6931472
    %v45 = vmul.f32 %v40, %v44
    %v46 = vsel %vm42, %v45, 0.0
    %v47 = vlaneseq
    %v48 = vshrl.u32 %v47, 7
    %v49 = vsub.s32 0, %v48
    %v50 = vrot.slane %v41, %v49
    %v51 = vmul.f32 %v40, %v50
    %v52 = vsub.f32 %v51, %v46
    %v53 = vlaneseq
    %v54 = vshrl.u32 %v53, 7
    %v55 = vsub.s32 1, %v54
    %v56 = vrot.slane %v41, %v55
    %v57 = vmul.f32 %v39, %v56
    %v58 = vsub.f32 %v52, %v57
    %vm59 = vcmask 261120
    %v61 = vsel %vm59, 1.0, 0
    %v64 = vsel %vm59, %v58, 0
    %66 = vmatprep.subr.mxu0 0.0
    %v67 = vand.u32 %v64, 4294901760
    %68 = vmatpush1.xpose.msra.mxu0 %v67
    %69 = vmatprep.subr.mxu0 0.0
    %70 = vmatpush1.xpose.msra.mxu0 0.0
    %71 = vmatprep.subr.mxu0 0.0
    %72 = vmatpush1.xpose.msra.mxu0 0.0
    %73 = vmatprep.subr.mxu0 0.0
    %74 = vmatpush1.xpose.msra.mxu0 0.0
    %75 = vmatprep.subr.mxu0 0.0
    %76 = vmatpush1.xpose.msra.mxu0 0.0
    %77 = vmatprep.subr.mxu0 0.0
    %78 = vmatpush1.xpose.msra.mxu0 0.0
    %79 = vmatprep.subr.mxu0 0.0
    %80 = vmatpush1.xpose.msra.mxu0 0.0
    %81 = vmatprep.subr.mxu0 0.0
    %82 = vmatpush1.xpose.msra.mxu0 0.0
    %83 = vmatprep.subr.mxu0 0.0
    %84 = vmatpush1.xpose.msra.mxu0 0.0
    %85 = vmatprep.subr.mxu0 0.0
    %86 = vmatpush1.xpose.msra.mxu0 0.0
    %87 = vmatprep.subr.mxu0 0.0
    %88 = vmatpush1.xpose.msra.mxu0 0.0
    %89 = vmatprep.subr.mxu0 0.0
    %90 = vmatpush1.xpose.msra.mxu0 0.0
    %91 = vmatprep.subr.mxu0 0.0
    %92 = vmatpush1.xpose.msra.mxu0 0.0
    %93 = vmatprep.subr.mxu0 0.0
    %94 = vmatpush1.xpose.msra.mxu0 0.0
    %95 = vmatprep.subr.mxu0 0.0
    %96 = vmatpush1.xpose.msra.mxu0 0.0
    %97 = vmatprep.subr.mxu0 0.0
    %98 = vmatpush1.xpose.msra.mxu0 0.0
    %99 = vmatprep.subr.mxu0 0.0
    %100 = vmatpush1.xpose.msra.mxu0 0.0
    %101 = vmatprep.subr.mxu0 0.0
    %102 = vmatpush1.xpose.msra.mxu0 0.0
    %103 = vmatprep.subr.mxu0 0.0
    %104 = vmatpush1.xpose.msra.mxu0 0.0
    %105 = vmatprep.subr.mxu0 0.0
    %106 = vmatpush1.xpose.msra.mxu0 0.0
    %107 = vmatprep.subr.mxu0 0.0
    %108 = vmatpush1.xpose.msra.mxu0 0.0
    %109 = vmatprep.subr.mxu0 0.0
    %110 = vmatpush1.xpose.msra.mxu0 0.0
    %111 = vmatprep.subr.mxu0 0.0
    %112 = vmatpush1.xpose.msra.mxu0 0.0
    %113 = vmatprep.subr.mxu0 0.0
    %114 = vmatpush1.xpose.msra.mxu0 0.0
    %115 = vmatprep.subr.mxu0 0.0
    %116 = vmatpush1.xpose.msra.mxu0 0.0
    %117 = vmatprep.subr.mxu0 0.0
    %118 = vmatpush1.xpose.msra.mxu0 0.0
    %119 = vmatprep.subr.mxu0 0.0
    %120 = vmatpush1.xpose.msra.mxu0 0.0
    %121 = vmatprep.subr.mxu0 0.0
    %122 = vmatpush1.xpose.msra.mxu0 0.0
    %123 = vmatprep.subr.mxu0 0.0
    %124 = vmatpush1.xpose.msra.mxu0 0.0
    %125 = vmatprep.subr.mxu0 0.0
    %126 = vmatpush1.xpose.msra.mxu0 0.0
    %127 = vmatprep.subr.mxu0 0.0
    %128 = vmatpush1.xpose.msra.mxu0 0.0
    %129 = vmatprep.subr.mxu0 0.0
    %130 = vmatpush1.xpose.msra.mxu0 0.0
    %131 = vmatprep.mubr.f32.mxu0 0.0
    %v132 = vand.u32 %v61, 4294901760
    %v133 = vsub.f32 %v61, %v132
    %v134 = vand.u32 %v133, 4294901760
    %v135 = vsub.f32 %v133, %v134
    %v136 = vand.u32 %v135, 4294901760
    %137 = vmatmul.mubr.f32.gmra.mrb[0].mxu0 %v136
    %v138 = vpop.f32.mrb[0].mxu0
    %v139 = vadd.f32 0.0, %v138
    %v140 = vpop.f32.mrb[0].mxu0
    %141 = vdwg.mxu0
    %142 = vmatprep.subr.mxu0 0.0
    %v143 = vand.u32 %v64, 4294901760
    %v144 = vsub.f32 %v64, %v143
    %v145 = vand.u32 %v144, 4294901760
    %v146 = vsub.f32 %v144, %v145
    %v147 = vand.u32 %v146, 4294901760
    %148 = vmatpush1.xpose.msra.mxu0 %v147
    %149 = vmatprep.subr.mxu0 0.0
    %150 = vmatpush1.xpose.msra.mxu0 0.0
    %151 = vmatprep.subr.mxu0 0.0
    %152 = vmatpush1.xpose.msra.mxu0 0.0
    %153 = vmatprep.subr.mxu0 0.0
    %154 = vmatpush1.xpose.msra.mxu0 0.0
    %155 = vmatprep.subr.mxu0 0.0
    %156 = vmatpush1.xpose.msra.mxu0 0.0
    %157 = vmatprep.subr.mxu0 0.0
    %158 = vmatpush1.xpose.msra.mxu0 0.0
    %159 = vmatprep.subr.mxu0 0.0
    %160 = vmatpush1.xpose.msra.mxu0 0.0
    %161 = vmatprep.subr.mxu0 0.0
    %162 = vmatpush1.xpose.msra.mxu0 0.0
    %163 = vmatprep.subr.mxu0 0.0
    %164 = vmatpush1.xpose.msra.mxu0 0.0
    %165 = vmatprep.subr.mxu0 0.0
    %166 = vmatpush1.xpose.msra.mxu0 0.0
    %167 = vmatprep.subr.mxu0 0.0
    %168 = vmatpush1.xpose.msra.mxu0 0.0
    %169 = vmatprep.subr.mxu0 0.0
    %170 = vmatpush1.xpose.msra.mxu0 0.0
    %171 = vmatprep.subr.mxu0 0.0
    %172 = vmatpush1.xpose.msra.mxu0 0.0
    %173 = vmatprep.subr.mxu0 0.0
    %174 = vmatpush1.xpose.msra.mxu0 0.0
    %175 = vmatprep.subr.mxu0 0.0
    %176 = vmatpush1.xpose.msra.mxu0 0.0
    %177 = vmatprep.subr.mxu0 0.0
    %178 = vmatpush1.xpose.msra.mxu0 0.0
    %179 = vmatprep.subr.mxu0 0.0
    %180 = vmatpush1.xpose.msra.mxu0 0.0
    %181 = vmatprep.subr.mxu0 0.0
    %182 = vmatpush1.xpose.msra.mxu0 0.0
    %183 = vmatprep.subr.mxu0 0.0
    %184 = vmatpush1.xpose.msra.mxu0 0.0
    %185 = vmatprep.subr.mxu0 0.0
    %186 = vmatpush1.xpose.msra.mxu0 0.0
    %187 = vmatprep.subr.mxu0 0.0
    %188 = vmatpush1.xpose.msra.mxu0 0.0
    %189 = vmatprep.subr.mxu0 0.0
    %190 = vmatpush1.xpose.msra.mxu0 0.0
    %191 = vmatprep.subr.mxu0 0.0
    %192 = vmatpush1.xpose.msra.mxu0 0.0
    %193 = vmatprep.subr.mxu0 0.0
    %194 = vmatpush1.xpose.msra.mxu0 0.0
    %195 = vmatprep.subr.mxu0 0.0
    %196 = vmatpush1.xpose.msra.mxu0 0.0
    %197 = vmatprep.subr.mxu0 0.0
    %198 = vmatpush1.xpose.msra.mxu0 0.0
    %199 = vmatprep.subr.mxu0 0.0
    %200 = vmatpush1.xpose.msra.mxu0 0.0
    %201 = vmatprep.subr.mxu0 0.0
    %202 = vmatpush1.xpose.msra.mxu0 0.0
    %203 = vmatprep.subr.mxu0 0.0
    %204 = vmatpush1.xpose.msra.mxu0 0.0
    %205 = vmatprep.subr.mxu0 0.0
    %206 = vmatpush1.xpose.msra.mxu0 0.0
    %207 = vmatprep.subr.mxu0 0.0
    %208 = vmatpush1.xpose.msra.mxu0 0.0
    %209 = vmatprep.subr.mxu0 0.0
    %210 = vmatpush1.xpose.msra.mxu0 0.0
    %211 = vmatprep.mubr.f32.mxu0 0.0
    %v212 = vand.u32 %v61, 4294901760
    %213 = vmatmul.mubr.f32.gmra.mrb[0].mxu0 %v212
    %v214 = vpop.f32.mrb[0].mxu0
    %v215 = vadd.f32 %v139, %v214
    %v216 = vpop.f32.mrb[0].mxu0
    %217 = vdwg.mxu0
    %218 = vmatprep.subr.mxu0 0.0
    %v219 = vand.u32 %v64, 4294901760
    %v220 = vsub.f32 %v64, %v219
    %221 = vmatpush1.xpose.msra.mxu0 %v220
    %222 = vmatprep.subr.mxu0 0.0
    %223 = vmatpush1.xpose.msra.mxu0 0.0
    %224 = vmatprep.subr.mxu0 0.0
    %225 = vmatpush1.xpose.msra.mxu0 0.0
    %226 = vmatprep.subr.mxu0 0.0
    %227 = vmatpush1.xpose.msra.mxu0 0.0
    %228 = vmatprep.subr.mxu0 0.0
    %229 = vmatpush1.xpose.msra.mxu0 0.0
    %230 = vmatprep.subr.mxu0 0.0
    %231 = vmatpush1.xpose.msra.mxu0 0.0
    %232 = vmatprep.subr.mxu0 0.0
    %233 = vmatpush1.xpose.msra.mxu0 0.0
    %234 = vmatprep.subr.mxu0 0.0
    %235 = vmatpush1.xpose.msra.mxu0 0.0
    %236 = vmatprep.subr.mxu0 0.0
    %237 = vmatpush1.xpose.msra.mxu0 0.0
    %238 = vmatprep.subr.mxu0 0.0
    %239 = vmatpush1.xpose.msra.mxu0 0.0
    %240 = vmatprep.subr.mxu0 0.0
    %241 = vmatpush1.xpose.msra.mxu0 0.0
    %242 = vmatprep.subr.mxu0 0.0
    %243 = vmatpush1.xpose.msra.mxu0 0.0
    %244 = vmatprep.subr.mxu0 0.0
    %245 = vmatpush1.xpose.msra.mxu0 0.0
    %246 = vmatprep.subr.mxu0 0.0
    %247 = vmatpush1.xpose.msra.mxu0 0.0
    %248 = vmatprep.subr.mxu0 0.0
    %249 = vmatpush1.xpose.msra.mxu0 0.0
    %250 = vmatprep.subr.mxu0 0.0
    %251 = vmatpush1.xpose.msra.mxu0 0.0
    %252 = vmatprep.subr.mxu0 0.0
    %253 = vmatpush1.xpose.msra.mxu0 0.0
    %254 = vmatprep.subr.mxu0 0.0
    %255 = vmatpush1.xpose.msra.mxu0 0.0
    %256 = vmatprep.subr.mxu0 0.0
    %257 = vmatpush1.xpose.msra.mxu0 0.0
    %258 = vmatprep.subr.mxu0 0.0
    %259 = vmatpush1.xpose.msra.mxu0 0.0
    %260 = vmatprep.subr.mxu0 0.0
    %261 = vmatpush1.xpose.msra.mxu0 0.0
    %262 = vmatprep.subr.mxu0 0.0
    %263 = vmatpush1.xpose.msra.mxu0 0.0
    %264 = vmatprep.subr.mxu0 0.0
    %265 = vmatpush1.xpose.msra.mxu0 0.0
    %266 = vmatprep.subr.mxu0 0.0
    %267 = vmatpush1.xpose.msra.mxu0 0.0
    %268 = vmatprep.subr.mxu0 0.0
    %269 = vmatpush1.xpose.msra.mxu0 0.0
    %270 = vmatprep.subr.mxu0 0.0
    %271 = vmatpush1.xpose.msra.mxu0 0.0
    %272 = vmatprep.subr.mxu0 0.0
    %273 = vmatpush1.xpose.msra.mxu0 0.0
    %274 = vmatprep.subr.mxu0 0.0
    %275 = vmatpush1.xpose.msra.mxu0 0.0
    %276 = vmatprep.subr.mxu0 0.0
    %277 = vmatpush1.xpose.msra.mxu0 0.0
    %278 = vmatprep.subr.mxu0 0.0
    %279 = vmatpush1.xpose.msra.mxu0 0.0
    %280 = vmatprep.subr.mxu0 0.0
    %281 = vmatpush1.xpose.msra.mxu0 0.0
    %282 = vmatprep.subr.mxu0 0.0
    %283 = vmatpush1.xpose.msra.mxu0 0.0
    %284 = vmatprep.mubr.f32.mxu0 0.0
    %v285 = vand.u32 %v61, 4294901760
    %v286 = vsub.f32 %v61, %v285
    %287 = vmatmul.mubr.f32.gmra.mrb[0].mxu0 %v286
    %v288 = vpop.f32.mrb[0].mxu0
    %v289 = vadd.f32 %v215, %v288
    %v290 = vpop.f32.mrb[0].mxu0
    %291 = vdwg.mxu0
    %292 = vmatprep.subr.mxu0 0.0
    %v293 = vand.u32 %v64, 4294901760
    %294 = vmatpush1.xpose.msra.mxu0 %v293
    %295 = vmatprep.subr.mxu0 0.0
    %296 = vmatpush1.xpose.msra.mxu0 0.0
    %297 = vmatprep.subr.mxu0 0.0
    %298 = vmatpush1.xpose.msra.mxu0 0.0
    %299 = vmatprep.subr.mxu0 0.0
    %300 = vmatpush1.xpose.msra.mxu0 0.0
    %301 = vmatprep.subr.mxu0 0.0
    %302 = vmatpush1.xpose.msra.mxu0 0.0
    %303 = vmatprep.subr.mxu0 0.0
    %304 = vmatpush1.xpose.msra.mxu0 0.0
    %305 = vmatprep.subr.mxu0 0.0
    %306 = vmatpush1.xpose.msra.mxu0 0.0
    %307 = vmatprep.subr.mxu0 0.0
    %308 = vmatpush1.xpose.msra.mxu0 0.0
    %309 = vmatprep.subr.mxu0 0.0
    %310 = vmatpush1.xpose.msra.mxu0 0.0
    %311 = vmatprep.subr.mxu0 0.0
    %312 = vmatpush1.xpose.msra.mxu0 0.0
    %313 = vmatprep.subr.mxu0 0.0
    %314 = vmatpush1.xpose.msra.mxu0 0.0
    %315 = vmatprep.subr.mxu0 0.0
    %316 = vmatpush1.xpose.msra.mxu0 0.0
    %317 = vmatprep.subr.mxu0 0.0
    %318 = vmatpush1.xpose.msra.mxu0 0.0
    %319 = vmatprep.subr.mxu0 0.0
    %320 = vmatpush1.xpose.msra.mxu0 0.0
    %321 = vmatprep.subr.mxu0 0.0
    %322 = vmatpush1.xpose.msra.mxu0 0.0
    %323 = vmatprep.subr.mxu0 0.0
    %324 = vmatpush1.xpose.msra.mxu0 0.0
    %325 = vmatprep.subr.mxu0 0.0
    %326 = vmatpush1.xpose.msra.mxu0 0.0
    %327 = vmatprep.subr.mxu0 0.0
    %328 = vmatpush1.xpose.msra.mxu0 0.0
    %329 = vmatprep.subr.mxu0 0.0
    %330 = vmatpush1.xpose.msra.mxu0 0.0
    %331 = vmatprep.subr.mxu0 0.0
    %332 = vmatpush1.xpose.msra.mxu0 0.0
    %333 = vmatprep.subr.mxu0 0.0
    %334 = vmatpush1.xpose.msra.mxu0 0.0
    %335 = vmatprep.subr.mxu0 0.0
    %336 = vmatpush1.xpose.msra.mxu0 0.0
    %337 = vmatprep.subr.mxu0 0.0
    %338 = vmatpush1.xpose.msra.mxu0 0.0
    %339 = vmatprep.subr.mxu0 0.0
    %340 = vmatpush1.xpose.msra.mxu0 0.0
    %341 = vmatprep.subr.mxu0 0.0
    %342 = vmatpush1.xpose.msra.mxu0 0.0
    %343 = vmatprep.subr.mxu0 0.0
    %344 = vmatpush1.xpose.msra.mxu0 0.0
    %345 = vmatprep.subr.mxu0 0.0
    %346 = vmatpush1.xpose.msra.mxu0 0.0
    %347 = vmatprep.subr.mxu0 0.0
    %348 = vmatpush1.xpose.msra.mxu0 0.0
    %349 = vmatprep.subr.mxu0 0.0
    %350 = vmatpush1.xpose.msra.mxu0 0.0
    %351 = vmatprep.subr.mxu0 0.0
    %352 = vmatpush1.xpose.msra.mxu0 0.0
    %353 = vmatprep.subr.mxu0 0.0
    %354 = vmatpush1.xpose.msra.mxu0 0.0
    %355 = vmatprep.subr.mxu0 0.0
    %356 = vmatpush1.xpose.msra.mxu0 0.0
    %357 = vmatprep.mubr.f32.mxu0 0.0
    %v358 = vand.u32 %v61, 4294901760
    %v359 = vsub.f32 %v61, %v358
    %v360 = vand.u32 %v359, 4294901760
    %361 = vmatmul.mubr.f32.gmra.mrb[0].mxu0 %v360
    %v362 = vpop.f32.mrb[0].mxu0
    %v363 = vadd.f32 %v289, %v362
    %v364 = vpop.f32.mrb[0].mxu0
    %365 = vdwg.mxu0
    %366 = vmatprep.subr.mxu0 0.0
    %v367 = vand.u32 %v64, 4294901760
    %v368 = vsub.f32 %v64, %v367
    %v369 = vand.u32 %v368, 4294901760
    %370 = vmatpush1.xpose.msra.mxu0 %v369
    %371 = vmatprep.subr.mxu0 0.0
    %372 = vmatpush1.xpose.msra.mxu0 0.0
    %373 = vmatprep.subr.mxu0 0.0
    %374 = vmatpush1.xpose.msra.mxu0 0.0
    %375 = vmatprep.subr.mxu0 0.0
    %376 = vmatpush1.xpose.msra.mxu0 0.0
    %377 = vmatprep.subr.mxu0 0.0
    %378 = vmatpush1.xpose.msra.mxu0 0.0
    %379 = vmatprep.subr.mxu0 0.0
    %380 = vmatpush1.xpose.msra.mxu0 0.0
    %381 = vmatprep.subr.mxu0 0.0
    %382 = vmatpush1.xpose.msra.mxu0 0.0
    %383 = vmatprep.subr.mxu0 0.0
    %384 = vmatpush1.xpose.msra.mxu0 0.0
    %385 = vmatprep.subr.mxu0 0.0
    %386 = vmatpush1.xpose.msra.mxu0 0.0
    %387 = vmatprep.subr.mxu0 0.0
    %388 = vmatpush1.xpose.msra.mxu0 0.0
    %389 = vmatprep.subr.mxu0 0.0
    %390 = vmatpush1.xpose.msra.mxu0 0.0
    %391 = vmatprep.subr.mxu0 0.0
    %392 = vmatpush1.xpose.msra.mxu0 0.0
    %393 = vmatprep.subr.mxu0 0.0
    %394 = vmatpush1.xpose.msra.mxu0 0.0
    %395 = vmatprep.subr.mxu0 0.0
    %396 = vmatpush1.xpose.msra.mxu0 0.0
    %397 = vmatprep.subr.mxu0 0.0
    %398 = vmatpush1.xpose.msra.mxu0 0.0
    %399 = vmatprep.subr.mxu0 0.0
    %400 = vmatpush1.xpose.msra.mxu0 0.0
    %401 = vmatprep.subr.mxu0 0.0
    %402 = vmatpush1.xpose.msra.mxu0 0.0
    %403 = vmatprep.subr.mxu0 0.0
    %404 = vmatpush1.xpose.msra.mxu0 0.0
    %405 = vmatprep.subr.mxu0 0.0
    %406 = vmatpush1.xpose.msra.mxu0 0.0
    %407 = vmatprep.subr.mxu0 0.0
    %408 = vmatpush1.xpose.msra.mxu0 0.0
    %409 = vmatprep.subr.mxu0 0.0
    %410 = vmatpush1.xpose.msra.mxu0 0.0
    %411 = vmatprep.subr.mxu0 0.0
    %412 = vmatpush1.xpose.msra.mxu0 0.0
    %413 = vmatprep.subr.mxu0 0.0
    %414 = vmatpush1.xpose.msra.mxu0 0.0
    %415 = vmatprep.subr.mxu0 0.0
    %416 = vmatpush1.xpose.msra.mxu0 0.0
    %417 = vmatprep.subr.mxu0 0.0
    %418 = vmatpush1.xpose.msra.mxu0 0.0
    %419 = vmatprep.subr.mxu0 0.0
    %420 = vmatpush1.xpose.msra.mxu0 0.0
    %421 = vmatprep.subr.mxu0 0.0
    %422 = vmatpush1.xpose.msra.mxu0 0.0
    %423 = vmatprep.subr.mxu0 0.0
    %424 = vmatpush1.xpose.msra.mxu0 0.0
    %425 = vmatprep.subr.mxu0 0.0
    %426 = vmatpush1.xpose.msra.mxu0 0.0
    %427 = vmatprep.subr.mxu0 0.0
    %428 = vmatpush1.xpose.msra.mxu0 0.0
    %429 = vmatprep.subr.mxu0 0.0
    %430 = vmatpush1.xpose.msra.mxu0 0.0
    %431 = vmatprep.subr.mxu0 0.0
    %432 = vmatpush1.xpose.msra.mxu0 0.0
    %433 = vmatprep.mubr.f32.mxu0 0.0
    %v434 = vand.u32 %v61, 4294901760
    %435 = vmatmul.mubr.f32.gmra.mrb[0].mxu0 %v434
    %v436 = vpop.f32.mrb[0].mxu0
    %v437 = vadd.f32 %v363, %v436
    %v438 = vpop.f32.mrb[0].mxu0
    %439 = vdwg.mxu0
    %440 = vmatprep.subr.mxu0 0.0
    %v441 = vand.u32 %v64, 4294901760
    %442 = vmatpush1.xpose.msra.mxu0 %v441
    %443 = vmatprep.subr.mxu0 0.0
    %444 = vmatpush1.xpose.msra.mxu0 0.0
    %445 = vmatprep.subr.mxu0 0.0
    %446 = vmatpush1.xpose.msra.mxu0 0.0
    %447 = vmatprep.subr.mxu0 0.0
    %448 = vmatpush1.xpose.msra.mxu0 0.0
    %449 = vmatprep.subr.mxu0 0.0
    %450 = vmatpush1.xpose.msra.mxu0 0.0
    %451 = vmatprep.subr.mxu0 0.0
    %452 = vmatpush1.xpose.msra.mxu0 0.0
    %453 = vmatprep.subr.mxu0 0.0
    %454 = vmatpush1.xpose.msra.mxu0 0.0
    %455 = vmatprep.subr.mxu0 0.0
    %456 = vmatpush1.xpose.msra.mxu0 0.0
    %457 = vmatprep.subr.mxu0 0.0
    %458 = vmatpush1.xpose.msra.mxu0 0.0
    %459 = vmatprep.subr.mxu0 0.0
    %460 = vmatpush1.xpose.msra.mxu0 0.0
    %461 = vmatprep.subr.mxu0 0.0
    %462 = vmatpush1.xpose.msra.mxu0 0.0
    %463 = vmatprep.subr.mxu0 0.0
    %464 = vmatpush1.xpose.msra.mxu0 0.0
    %465 = vmatprep.subr.mxu0 0.0
    %466 = vmatpush1.xpose.msra.mxu0 0.0
    %467 = vmatprep.subr.mxu0 0.0
    %468 = vmatpush1.xpose.msra.mxu0 0.0
    %469 = vmatprep.subr.mxu0 0.0
    %470 = vmatpush1.xpose.msra.mxu0 0.0
    %471 = vmatprep.subr.mxu0 0.0
    %472 = vmatpush1.xpose.msra.mxu0 0.0
    %473 = vmatprep.subr.mxu0 0.0
    %474 = vmatpush1.xpose.msra.mxu0 0.0
    %475 = vmatprep.subr.mxu0 0.0
    %476 = vmatpush1.xpose.msra.mxu0 0.0
    %477 = vmatprep.subr.mxu0 0.0
    %478 = vmatpush1.xpose.msra.mxu0 0.0
    %479 = vmatprep.subr.mxu0 0.0
    %480 = vmatpush1.xpose.msra.mxu0 0.0
    %481 = vmatprep.subr.mxu0 0.0
    %482 = vmatpush1.xpose.msra.mxu0 0.0
    %483 = vmatprep.subr.mxu0 0.0
    %484 = vmatpush1.xpose.msra.mxu0 0.0
    %485 = vmatprep.subr.mxu0 0.0
    %486 = vmatpush1.xpose.msra.mxu0 0.0
    %487 = vmatprep.subr.mxu0 0.0
    %488 = vmatpush1.xpose.msra.mxu0 0.0
    %489 = vmatprep.subr.mxu0 0.0
    %490 = vmatpush1.xpose.msra.mxu0 0.0
    %491 = vmatprep.subr.mxu0 0.0
    %492 = vmatpush1.xpose.msra.mxu0 0.0
    %493 = vmatprep.subr.mxu0 0.0
    %494 = vmatpush1.xpose.msra.mxu0 0.0
    %495 = vmatprep.subr.mxu0 0.0
    %496 = vmatpush1.xpose.msra.mxu0 0.0
    %497 = vmatprep.subr.mxu0 0.0
    %498 = vmatpush1.xpose.msra.mxu0 0.0
    %499 = vmatprep.subr.mxu0 0.0
    %500 = vmatpush1.xpose.msra.mxu0 0.0
    %501 = vmatprep.subr.mxu0 0.0
    %502 = vmatpush1.xpose.msra.mxu0 0.0
    %503 = vmatprep.subr.mxu0 0.0
    %504 = vmatpush1.xpose.msra.mxu0 0.0
    %505 = vmatprep.mubr.f32.mxu0 0.0
    %v506 = vand.u32 %v61, 4294901760
    %507 = vmatmul.mubr.f32.gmra.mrb[0].mxu0 %v506
    %v508 = vpop.f32.mrb[0].mxu0
    %v509 = vadd.f32 %v437, %v508
    %v510 = vpop.f32.mrb[0].mxu0
    %511 = vdwg.mxu0
    %vm512 = vcmask 57344
    %513 = vst.msk [vmem:[#allocation7] sm:$0x1] %vm512, %v509
    // Predicated region
    $region22: #{tpu_custom_call.1} parent=1 // pred_check
      _
    $region23: #{tpu_custom_call.1} parent=1 // pred_check_branch
      %515 = sbr.rel (0) target = $region25
    $region24: #{tpu_custom_call.1} parent=1 // pred_region
      %s517 = ssub.s32 16, 16
      %518 = vsyncadd [#allocation4], %s517
      %s520 = sshll.u32 [#allocation7], 4
      %s521 = int_to_ptr.vmem [resolvable:$true] %s520
      %523 = dma.vmem_to_hbm [thread:$0]  %s521, 16, %s3, [#allocation4]
    $region25: #{tpu_custom_call.1} parent=1 // pred_fallthru
      _
    // Predicated region
    $region26: #{tpu_custom_call.1} parent=1 // pred_check
      _
    $region27: #{tpu_custom_call.1} parent=1 // pred_check_branch
      %525 = sbr.rel (0) target = $region29
    $region28: #{tpu_custom_call.1} parent=1 // pred_region
      %526 = dma.done [#allocation4], 16
    $region29: #{tpu_custom_call.1} parent=1 // pred_fallthru
      _
    %527 = vsyncpa [#allocation3], 1
    %528 = vsyncpa [#allocation6], 1
    %529 = vsyncpa [#allocation4], 1

</llo_original>
